<compile_context>
chip_gen: v6e
topology: v6e:2x2x1
jax: 0.10.0
libtpu: 0.0.40
codegen_flags: <defaults>
</compile_context>

<pallas_src>
import functools

import jax
import jax.numpy as jnp
from jax.experimental import pallas as pl
from jax.experimental.pallas import tpu as pltpu


def _round_up(x, m):
    return (x + m - 1) // m * m


def dqn_kernel(x_ref, w1_ref, b1_ref, w2_ref, b2_ref, w3_ref, b3_ref, o_ref):
    cdt = w1_ref.dtype  # matmul input dtype (bf16 or f32)

    x = x_ref[...]                                                     # (tb, in_pad)
    h1 = jnp.dot(x, w1_ref[...], preferred_element_type=jnp.float32) + b1_ref[...]
    h1 = jnp.maximum(h1, 0.0).astype(cdt)                              # ReLU

    h2 = jnp.dot(h1, w2_ref[...], preferred_element_type=jnp.float32) + b2_ref[...]
    h2 = jnp.maximum(h2, 0.0).astype(cdt)

    out = jnp.dot(h2, w3_ref[...], preferred_element_type=jnp.float32) + b3_ref[...]
    o_ref[...] = out.astype(o_ref.dtype)                               # lane-dense store


@functools.partial(jax.jit, static_argnames=("batch_tile", "compute_dtype"))
def dqn_forward(x, params, *, batch_tile=256, compute_dtype=jnp.bfloat16):
    """x: (B, input_size) float32. params: dict of w1,b1,w2,b2,w3,b3 (f32)."""
    w1, b1 = params["w1"], params["b1"]
    w2, b2 = params["w2"], params["b2"]
    w3, b3 = params["w3"], params["b3"]

    B, in_dim = x.shape
    hid = w1.shape[1]
    out_dim = w3.shape[1]

    # Lane-dense padding of the feature dims (multiples of 128).
    in_pad = _round_up(in_dim, 128)
    out_pad = _round_up(out_dim, 128)

    # Batch tiling: tile is a multiple of 8; batch is zero-padded to a whole
    # number of tiles so every block load/store is full-size.
    tile = max(8, min(_round_up(batch_tile, 8), _round_up(B, 8)))
    Bp = _round_up(B, tile)
    # Prefer >=2 grid steps so the 'parallel' axis can use both TCs on v7x.
    if Bp // tile < 2 and Bp >= 16:
        tile = max(8, _round_up(Bp // 2, 8))
        Bp = _round_up(B, tile)

    # Wrapper-side zero padding + dtype casts (cheap; keeps the kernel clean).
    xp = jnp.zeros((Bp, in_pad), compute_dtype).at[:B, :in_dim].set(
        x.astype(compute_dtype))
    w1p = jnp.zeros((in_pad, hid), compute_dtype).at[:in_dim, :].set(
        w1.astype(compute_dtype))
    w2p = w2.astype(compute_dtype)
    w3p = jnp.zeros((hid, out_pad), compute_dtype).at[:, :out_dim].set(
        w3.astype(compute_dtype))
    b1p = b1.astype(jnp.float32)
    b2p = b2.astype(jnp.float32)
    b3p = jnp.zeros((1, out_pad), jnp.float32).at[:, :out_dim].set(
        b3.astype(jnp.float32))

    grid = (Bp // tile,)
    full = lambda r, c: pl.BlockSpec((r, c), lambda i: (0, 0))  # whole-array block

    out = pl.pallas_call(
        dqn_kernel,
        out_shape=jax.ShapeDtypeStruct((Bp, out_pad), jnp.float32),
        grid=grid,
        in_specs=[
            pl.BlockSpec((tile, in_pad), lambda i: (i, 0)),  # x tile over batch
            full(in_pad, hid),    # w1
            full(1, hid),         # b1
            full(hid, hid),       # w2
            full(1, hid),         # b2
            full(hid, out_pad),   # w3
            full(1, out_pad),     # b3
        ],
        out_specs=pl.BlockSpec((tile, out_pad), lambda i: (i, 0)),
        compiler_params=pltpu.CompilerParams(
            dimension_semantics=("parallel",)),
    )(xp, w1p, b1p, w2p, b2p, w3p, b3p)

    # Strip batch / output-lane padding.
    return out[:B, :out_dim]


def init_dqn_params(key, input_size, output_size, hidden_dim=128):
    """Deterministic init mimicking nn.Linear's uniform(-1/sqrt(fan_in), 1/sqrt(fan_in))."""
    ks = jax.random.split(key, 6)

    def linear(kw, kb, fan_in, fan_out):
        bound = 1.0 / jnp.sqrt(fan_in)
        w = jax.random.uniform(kw, (fan_in, fan_out), jnp.float32, -bound, bound)
        b = jax.random.uniform(kb, (1, fan_out), jnp.float32, -bound, bound)
        return w, b

    w1, b1 = linear(ks[0], ks[1], input_size, hidden_dim)
    w2, b2 = linear(ks[2], ks[3], hidden_dim, hidden_dim)
    w3, b3 = linear(ks[4], ks[5], hidden_dim, output_size)
    return {"w1": w1, "b1": b1, "w2": w2, "b2": b2, "w3": w3, "b3": b3}


def dqn_forward_ref(x, params):
    """Pure-JAX f32 reference for correctness check."""
    h1 = jax.nn.relu(x @ params["w1"] + params["b1"])
    h2 = jax.nn.relu(h1 @ params["w2"] + params["b2"])
    return h2 @ params["w3"] + params["b3"]


if __name__ == "__main__":
    key = jax.random.PRNGKey(0)
    k_params, k_x = jax.random.split(key)

    input_size = 32
    output_size = 8
    hidden_dim = 128
    batch = 64  # small DQN-style minibatch; yields 2 parallel grid steps

    params = init_dqn_params(k_params, input_size, output_size, hidden_dim)
    x = jax.random.normal(k_x, (batch, input_size), jnp.float32)

    ref = dqn_forward_ref(x, params)

    # Default fast path: bf16 matmul inputs, f32 accumulation.
    out_bf16 = jax.block_until_ready(
        dqn_forward(x, params, compute_dtype=jnp.bfloat16))
    assert out_bf16.shape == (batch, output_size)
    assert jnp.allclose(out_bf16, ref, atol=5e-2, rtol=5e-2), "bf16 mismatch vs reference"

    # Full-precision path: tight tolerance.
    out_f32 = jax.block_until_ready(
        dqn_forward(x, params, compute_dtype=jnp.float32))
    assert out_f32.shape == (batch, output_size)
    assert jnp.allclose(out_f32, ref, atol=1e-4, rtol=1e-4), "f32 mismatch vs reference"

    print("KERNEL_OK")
</pallas_src>

<mosaic_0001>
module attributes {stable_mosaic.version = 11 : i64} {
  func.func @dqn_kernel(%arg0: i32, %arg1: memref<32x128xbf16, #tpu.memory_space<vmem>>, %arg2: memref<128x128xbf16, #tpu.memory_space<vmem>>, %arg3: memref<1x128xf32, #tpu.memory_space<vmem>>, %arg4: memref<128x128xbf16, #tpu.memory_space<vmem>>, %arg5: memref<1x128xf32, #tpu.memory_space<vmem>>, %arg6: memref<128x128xbf16, #tpu.memory_space<vmem>>, %arg7: memref<1x128xf32, #tpu.memory_space<vmem>>, %arg8: memref<32x128xf32, #tpu.memory_space<vmem>>) attributes {dimension_semantics = [#tpu.dimension_semantics<parallel>], iteration_bounds = array<i64: 2>, scalar_prefetch = 0 : i64, scratch_operands = 0 : i64, tpu.core_type = #tpu.core_type<tc>, window_params = [{transform_indices = @transform_0, window_bounds = array<i64: 32, 128>}, {pipeline_mode = #tpu.pipeline_mode<synchronous>, transform_indices = @transform_1, window_bounds = array<i64: 128, 128>}, {pipeline_mode = #tpu.pipeline_mode<synchronous>, transform_indices = @transform_2, window_bounds = array<i64: 1, 128>}, {pipeline_mode = #tpu.pipeline_mode<synchronous>, transform_indices = @transform_3, window_bounds = array<i64: 128, 128>}, {pipeline_mode = #tpu.pipeline_mode<synchronous>, transform_indices = @transform_4, window_bounds = array<i64: 1, 128>}, {pipeline_mode = #tpu.pipeline_mode<synchronous>, transform_indices = @transform_5, window_bounds = array<i64: 128, 128>}, {pipeline_mode = #tpu.pipeline_mode<synchronous>, transform_indices = @transform_6, window_bounds = array<i64: 1, 128>}, {transform_indices = @transform_7, window_bounds = array<i64: 32, 128>}]} {
    %c0 = arith.constant 0 : index
    %c0_0 = arith.constant 0 : index
    %0 = vector.load %arg1[%c0, %c0_0] : memref<32x128xbf16, #tpu.memory_space<vmem>>, vector<32x128xbf16>
    %c0_1 = arith.constant 0 : index
    %c0_2 = arith.constant 0 : index
    %1 = vector.load %arg2[%c0_1, %c0_2] : memref<128x128xbf16, #tpu.memory_space<vmem>>, vector<128x128xbf16>
    %cst = arith.constant dense<0.000000e+00> : vector<32x128xf32>
    %2 = tpu.matmul %0, %1, %cst {dimension_numbers = #tpu.dot_dimension_numbers<[1], [0], [0], [1], [0, 0, 1, 1], [], []>} : vector<32x128xbf16>, vector<128x128xbf16>, vector<32x128xf32> -> vector<32x128xf32>
    %c0_3 = arith.constant 0 : index
    %c0_4 = arith.constant 0 : index
    %3 = vector.load %arg3[%c0_3, %c0_4] : memref<1x128xf32, #tpu.memory_space<vmem>>, vector<1x128xf32>
    %4 = vector.broadcast %3 : vector<1x128xf32> to vector<32x128xf32>
    %5 = arith.addf %2, %4 : vector<32x128xf32>
    %cst_5 = arith.constant 0.000000e+00 : f32
    %6 = vector.broadcast %cst_5 : f32 to vector<32x128xf32>
    %7 = arith.maximumf %5, %6 : vector<32x128xf32>
    %8 = arith.truncf %7 : vector<32x128xf32> to vector<32x128xbf16>
    %c0_6 = arith.constant 0 : index
    %c0_7 = arith.constant 0 : index
    %9 = vector.load %arg4[%c0_6, %c0_7] : memref<128x128xbf16, #tpu.memory_space<vmem>>, vector<128x128xbf16>
    %cst_8 = arith.constant dense<0.000000e+00> : vector<32x128xf32>
    %10 = tpu.matmul %8, %9, %cst_8 {dimension_numbers = #tpu.dot_dimension_numbers<[1], [0], [0], [1], [0, 0, 1, 1], [], []>} : vector<32x128xbf16>, vector<128x128xbf16>, vector<32x128xf32> -> vector<32x128xf32>
    %c0_9 = arith.constant 0 : index
    %c0_10 = arith.constant 0 : index
    %11 = vector.load %arg5[%c0_9, %c0_10] : memref<1x128xf32, #tpu.memory_space<vmem>>, vector<1x128xf32>
    %12 = vector.broadcast %11 : vector<1x128xf32> to vector<32x128xf32>
    %13 = arith.addf %10, %12 : vector<32x128xf32>
    %cst_11 = arith.constant 0.000000e+00 : f32
    %14 = vector.broadcast %cst_11 : f32 to vector<32x128xf32>
    %15 = arith.maximumf %13, %14 : vector<32x128xf32>
    %16 = arith.truncf %15 : vector<32x128xf32> to vector<32x128xbf16>
    %c0_12 = arith.constant 0 : index
    %c0_13 = arith.constant 0 : index
    %17 = vector.load %arg6[%c0_12, %c0_13] : memref<128x128xbf16, #tpu.memory_space<vmem>>, vector<128x128xbf16>
    %cst_14 = arith.constant dense<0.000000e+00> : vector<32x128xf32>
    %18 = tpu.matmul %16, %17, %cst_14 {dimension_numbers = #tpu.dot_dimension_numbers<[1], [0], [0], [1], [0, 0, 1, 1], [], []>} : vector<32x128xbf16>, vector<128x128xbf16>, vector<32x128xf32> -> vector<32x128xf32>
    %c0_15 = arith.constant 0 : index
    %c0_16 = arith.constant 0 : index
    %19 = vector.load %arg7[%c0_15, %c0_16] : memref<1x128xf32, #tpu.memory_space<vmem>>, vector<1x128xf32>
    %20 = vector.broadcast %19 : vector<1x128xf32> to vector<32x128xf32>
    %21 = arith.addf %18, %20 : vector<32x128xf32>
    %c0_17 = arith.constant 0 : index
    %c0_18 = arith.constant 0 : index
    %22 = vector.load %arg8[%c0_17, %c0_18] : memref<32x128xf32, #tpu.memory_space<vmem>>, vector<32x128xf32>
    tpu.vector_store %arg8[%c0_17, %c0_18], %21 {strides = array<i32>} : memref<32x128xf32, #tpu.memory_space<vmem>>, vector<32x128xf32>,
    return
  }
  func.func @transform_0(%arg0: i32) -> (i32, i32) {
    %c0_i32 = arith.constant 0 : i32
    %c0_i32_0 = arith.constant 0 : i32
    return %arg0, %c0_i32 : i32, i32
  }
  func.func @transform_1(%arg0: i32) -> (i32, i32) {
    %c0_i32 = arith.constant 0 : i32
    %c0_i32_0 = arith.constant 0 : i32
    %c0_i32_1 = arith.constant 0 : i32
    return %c0_i32, %c0_i32_0 : i32, i32
  }
  func.func @transform_2(%arg0: i32) -> (i32, i32) {
    %c0_i32 = arith.constant 0 : i32
    %c0_i32_0 = arith.constant 0 : i32
    %c0_i32_1 = arith.constant 0 : i32
    return %c0_i32, %c0_i32_0 : i32, i32
  }
  func.func @transform_3(%arg0: i32) -> (i32, i32) {
    %c0_i32 = arith.constant 0 : i32
    %c0_i32_0 = arith.constant 0 : i32
    %c0_i32_1 = arith.constant 0 : i32
    return %c0_i32, %c0_i32_0 : i32, i32
  }
  func.func @transform_4(%arg0: i32) -> (i32, i32) {
    %c0_i32 = arith.constant 0 : i32
    %c0_i32_0 = arith.constant 0 : i32
    %c0_i32_1 = arith.constant 0 : i32
    return %c0_i32, %c0_i32_0 : i32, i32
  }
  func.func @transform_5(%arg0: i32) -> (i32, i32) {
    %c0_i32 = arith.constant 0 : i32
    %c0_i32_0 = arith.constant 0 : i32
    %c0_i32_1 = arith.constant 0 : i32
    return %c0_i32, %c0_i32_0 : i32, i32
  }
  func.func @transform_6(%arg0: i32) -> (i32, i32) {
    %c0_i32 = arith.constant 0 : i32
    %c0_i32_0 = arith.constant 0 : i32
    %c0_i32_1 = arith.constant 0 : i32
    return %c0_i32, %c0_i32_0 : i32, i32
  }
  func.func @transform_7(%arg0: i32) -> (i32, i32) {
    %c0_i32 = arith.constant 0 : i32
    %c0_i32_0 = arith.constant 0 : i32
    return %arg0, %c0_i32 : i32, i32
  }
}

</mosaic_0001>

<llo_original>
// kernel: dqn_forward.1
$region0: #{dqn_forward.1}
  #allocation0 [shape = 'u32[]', space=smem, size = 0x4, offset = 0x4, fixed_abs, tag = 'smem constant byte address 0x4 - core index']
  #allocation1 [shape = 'u32[144,128]{1,0:T(1,128)}', space=vmem, size = 0x12000, scoped, tag = 'internal scratch']
  %s0 = inlined_call_operand.vmem [shape: bf16[64,128], index: 0, kind: input, shape index: {}]
  %s1 = inlined_call_operand.vmem [shape: bf16[128,128], index: 1, kind: input, shape index: {}]
  %s2 = inlined_call_operand.vmem [shape: f32[1,128], index: 2, kind: input, shape index: {}]
  %s3 = inlined_call_operand.vmem [shape: bf16[128,128], index: 3, kind: input, shape index: {}]
  %s4 = inlined_call_operand.vmem [shape: f32[1,128], index: 4, kind: input, shape index: {}]
  %s5 = inlined_call_operand.vmem [shape: bf16[128,128], index: 5, kind: input, shape index: {}]
  %s6 = inlined_call_operand.vmem [shape: f32[1,128], index: 6, kind: input, shape index: {}]
  %s7 = inlined_call_operand.vmem [shape: f32[64,128], index: 7, kind: output, shape index: {}]
  %s8 = sld [smem:[#allocation0]]
  $region61: #{dqn_forward.1} parent=0
    _
  %s10 = ssub.s32 1, %s8
  %s11 = scalar_select 0, %s10, %s8
  loop: start=0, step=1, limit=4
  $region2: #{dqn_forward.1} parent=0 // loop_pre_header
    _
  $region3: #{dqn_forward.1} parent=0 // loop_header
    %s13 = sphi 0, %s17
    %p14 = scmp.ge.s32.totalorder %s13, 4
    %s23 = sphi 0, %s25
    %s26 = sphi 0, %s23
    %s27 = sphi 0, %s26
    %s43 = sphi 0, %s27
    %s47 = sphi 0, %s47
    %s49 = sphi 0, %s47
    %s50 = sphi 0, %s49
    %s64 = sphi 0, %s50
    %s68 = sphi 0, %s68
    %s70 = sphi 0, %s68
    %s71 = sphi 0, %s70
    %s85 = sphi 0, %s71
    %s89 = sphi 0, %s89
    %s91 = sphi 0, %s89
    %s92 = sphi 0, %s91
    %s106 = sphi 0, %s92
    %s110 = sphi 0, %s110
    %s112 = sphi 0, %s110
    %s113 = sphi 0, %s112
    %s127 = sphi 0, %s113
    %s131 = sphi 0, %s131
    %s133 = sphi 0, %s131
    %s134 = sphi 0, %s133
    %s148 = sphi 0, %s134
    %s152 = sphi 0, %s152
    %s154 = sphi 0, %s152
    %s155 = sphi 0, %s154
    %s169 = sphi 0, %s155
    %s175 = sphi 0, %s177
    %s178 = sphi 0, %s175
    %s179 = sphi 0, %s178
    %s195 = sphi 0, %s179
  $region4: #{dqn_forward.1} parent=0 // loop_header_branch
    %16 = sbr.rel (%p14) target = $region8
  $region5: #{dqn_forward.1} parent=0 // loop_body
    %s18 = ssub.s32 %s13, 1
    %s19 = ssub.s32 %s13, 2
    %s20 = sadd.s32 %s13, 1
    %s21 = ssub.s32 %s13, %s20
    %p22 = scmp.eq.s32.totalorder %s21, 0
    %s24 = sadd.s32 %s23, 1
    %s25 = scalar_select %p22, %s23, %s24
    %p28 = pneg %p22
    %p29 = scmp.eq.s32.totalorder %s13, 1
    %p30 = por %p28, %p29
    %p31 = scmp.ne.s32.totalorder %s23, %s26
    %p32 = scmp.eq.s32.totalorder %s13, 0
    %p33 = por %p31, %p32
    %p34 = scmp.ne.s32.totalorder %s23, %s26
    %p35 = scmp.eq.s32.totalorder %s18, 1
    %p36 = por %p34, %p35
    %p37 = scmp.ne.s32.totalorder %s26, %s27
    %p38 = scmp.eq.s32.totalorder %s18, 0
    %p39 = por %p37, %p38
    %p40 = scmp.ne.s32.totalorder %s26, %s27
    %p41 = scmp.eq.s32.totalorder %s19, 1
    %p42 = por %p40, %p41
    %p44 = scmp.ne.s32.totalorder %s27, %s43
    %p45 = scmp.eq.s32.totalorder %s19, 0
    %p46 = por %p44, %p45
    %s48 = sadd.s32 %s47, 1
    %p51 = scmp.eq.s32.totalorder %s13, 1
    %p52 = scmp.ne.s32.totalorder %s47, %s49
    %p53 = scmp.eq.s32.totalorder %s13, 0
    %p54 = por %p52, %p53
    %p55 = scmp.ne.s32.totalorder %s47, %s49
    %p56 = scmp.eq.s32.totalorder %s18, 1
    %p57 = por %p55, %p56
    %p58 = scmp.ne.s32.totalorder %s49, %s50
    %p59 = scmp.eq.s32.totalorder %s18, 0
    %p60 = por %p58, %p59
    %p61 = scmp.ne.s32.totalorder %s49, %s50
    %p62 = scmp.eq.s32.totalorder %s19, 1
    %p63 = por %p61, %p62
    %p65 = scmp.ne.s32.totalorder %s50, %s64
    %p66 = scmp.eq.s32.totalorder %s19, 0
    %p67 = por %p65, %p66
    %s69 = sadd.s32 %s68, 1
    %p72 = scmp.eq.s32.totalorder %s13, 1
    %p73 = scmp.ne.s32.totalorder %s68, %s70
    %p74 = scmp.eq.s32.totalorder %s13, 0
    %p75 = por %p73, %p74
    %p76 = scmp.ne.s32.totalorder %s68, %s70
    %p77 = scmp.eq.s32.totalorder %s18, 1
    %p78 = por %p76, %p77
    %p79 = scmp.ne.s32.totalorder %s70, %s71
    %p80 = scmp.eq.s32.totalorder %s18, 0
    %p81 = por %p79, %p80
    %p82 = scmp.ne.s32.totalorder %s70, %s71
    %p83 = scmp.eq.s32.totalorder %s19, 1
    %p84 = por %p82, %p83
    %p86 = scmp.ne.s32.totalorder %s71, %s85
    %p87 = scmp.eq.s32.totalorder %s19, 0
    %p88 = por %p86, %p87
    %s90 = sadd.s32 %s89, 1
    %p93 = scmp.eq.s32.totalorder %s13, 1
    %p94 = scmp.ne.s32.totalorder %s89, %s91
    %p95 = scmp.eq.s32.totalorder %s13, 0
    %p96 = por %p94, %p95
    %p97 = scmp.ne.s32.totalorder %s89, %s91
    %p98 = scmp.eq.s32.totalorder %s18, 1
    %p99 = por %p97, %p98
    %p100 = scmp.ne.s32.totalorder %s91, %s92
    %p101 = scmp.eq.s32.totalorder %s18, 0
    %p102 = por %p100, %p101
    %p103 = scmp.ne.s32.totalorder %s91, %s92
    %p104 = scmp.eq.s32.totalorder %s19, 1
    %p105 = por %p103, %p104
    %p107 = scmp.ne.s32.totalorder %s92, %s106
    %p108 = scmp.eq.s32.totalorder %s19, 0
    %p109 = por %p107, %p108
    %s111 = sadd.s32 %s110, 1
    %p114 = scmp.eq.s32.totalorder %s13, 1
    %p115 = scmp.ne.s32.totalorder %s110, %s112
    %p116 = scmp.eq.s32.totalorder %s13, 0
    %p117 = por %p115, %p116
    %p118 = scmp.ne.s32.totalorder %s110, %s112
    %p119 = scmp.eq.s32.totalorder %s18, 1
    %p120 = por %p118, %p119
    %p121 = scmp.ne.s32.totalorder %s112, %s113
    %p122 = scmp.eq.s32.totalorder %s18, 0
    %p123 = por %p121, %p122
    %p124 = scmp.ne.s32.totalorder %s112, %s113
    %p125 = scmp.eq.s32.totalorder %s19, 1
    %p126 = por %p124, %p125
    %p128 = scmp.ne.s32.totalorder %s113, %s127
    %p129 = scmp.eq.s32.totalorder %s19, 0
    %p130 = por %p128, %p129
    %s132 = sadd.s32 %s131, 1
    %p135 = scmp.eq.s32.totalorder %s13, 1
    %p136 = scmp.ne.s32.totalorder %s131, %s133
    %p137 = scmp.eq.s32.totalorder %s13, 0
    %p138 = por %p136, %p137
    %p139 = scmp.ne.s32.totalorder %s131, %s133
    %p140 = scmp.eq.s32.totalorder %s18, 1
    %p141 = por %p139, %p140
    %p142 = scmp.ne.s32.totalorder %s133, %s134
    %p143 = scmp.eq.s32.totalorder %s18, 0
    %p144 = por %p142, %p143
    %p145 = scmp.ne.s32.totalorder %s133, %s134
    %p146 = scmp.eq.s32.totalorder %s19, 1
    %p147 = por %p145, %p146
    %p149 = scmp.ne.s32.totalorder %s134, %s148
    %p150 = scmp.eq.s32.totalorder %s19, 0
    %p151 = por %p149, %p150
    %s153 = sadd.s32 %s152, 1
    %p156 = scmp.eq.s32.totalorder %s13, 1
    %p157 = scmp.ne.s32.totalorder %s152, %s154
    %p158 = scmp.eq.s32.totalorder %s13, 0
    %p159 = por %p157, %p158
    %p160 = scmp.ne.s32.totalorder %s152, %s154
    %p161 = scmp.eq.s32.totalorder %s18, 1
    %p162 = por %p160, %p161
    %p163 = scmp.ne.s32.totalorder %s154, %s155
    %p164 = scmp.eq.s32.totalorder %s18, 0
    %p165 = por %p163, %p164
    %p166 = scmp.ne.s32.totalorder %s154, %s155
    %p167 = scmp.eq.s32.totalorder %s19, 1
    %p168 = por %p166, %p167
    %p170 = scmp.ne.s32.totalorder %s155, %s169
    %p171 = scmp.eq.s32.totalorder %s19, 0
    %p172 = por %p170, %p171
    %s173 = ssub.s32 %s13, %s20
    %p174 = scmp.eq.s32.totalorder %s173, 0
    %s176 = sadd.s32 %s175, 1
    %s177 = scalar_select %p174, %s175, %s176
    %p180 = pneg %p174
    %p181 = scmp.eq.s32.totalorder %s13, 1
    %p182 = por %p180, %p181
    %p183 = scmp.ne.s32.totalorder %s175, %s178
    %p184 = scmp.eq.s32.totalorder %s13, 0
    %p185 = por %p183, %p184
    %p186 = scmp.ne.s32.totalorder %s175, %s178
    %p187 = scmp.eq.s32.totalorder %s18, 1
    %p188 = por %p186, %p187
    %p189 = scmp.ne.s32.totalorder %s178, %s179
    %p190 = scmp.eq.s32.totalorder %s18, 0
    %p191 = por %p189, %p190
    %p192 = scmp.ne.s32.totalorder %s178, %s179
    %p193 = scmp.eq.s32.totalorder %s19, 1
    %p194 = por %p192, %p193
    %p196 = scmp.ne.s32.totalorder %s179, %s195
    %p197 = scmp.eq.s32.totalorder %s19, 0
    %p198 = por %p196, %p197
    %p199 = scmp.le.s32.totalorder 1, %s13
    %p200 = scmp.lt.s32.totalorder %s13, 3
    %p201 = pnand %p199, %p200
    %p202 = pneg %p201
    // Predicated region
    $region9: #{dqn_forward.1} parent=5 // pred_check
      _
    $region10: #{dqn_forward.1} parent=5 // pred_check_branch
      %204 = sbr.rel (%p201) target = $region12
    $region11: #{dqn_forward.1} parent=5 // pred_region
      %s205 = ssub.s32 %s13, 1
      // Predicated region
      $region13: #{dqn_forward.1} parent=11 // pred_check
        %p206 = pneg %p60
      $region14: #{dqn_forward.1} parent=11 // pred_check_branch
        %208 = sbr.rel (%p206) target = $region16
      $region15: #{dqn_forward.1} parent=11 // pred_region
        _
      $region16: #{dqn_forward.1} parent=11 // pred_fallthru
        _
      // Predicated region
      $region17: #{dqn_forward.1} parent=11 // pred_check
        %p209 = pneg %p81
      $region18: #{dqn_forward.1} parent=11 // pred_check_branch
        %211 = sbr.rel (%p209) target = $region20
      $region19: #{dqn_forward.1} parent=11 // pred_region
        _
      $region20: #{dqn_forward.1} parent=11 // pred_fallthru
        _
      // Predicated region
      $region21: #{dqn_forward.1} parent=11 // pred_check
        %p212 = pneg %p102
      $region22: #{dqn_forward.1} parent=11 // pred_check_branch
        %214 = sbr.rel (%p212) target = $region24
      $region23: #{dqn_forward.1} parent=11 // pred_region
        _
      $region24: #{dqn_forward.1} parent=11 // pred_fallthru
        _
      // Predicated region
      $region25: #{dqn_forward.1} parent=11 // pred_check
        %p215 = pneg %p123
      $region26: #{dqn_forward.1} parent=11 // pred_check_branch
        %217 = sbr.rel (%p215) target = $region28
      $region27: #{dqn_forward.1} parent=11 // pred_region
        _
      $region28: #{dqn_forward.1} parent=11 // pred_fallthru
        _
      // Predicated region
      $region29: #{dqn_forward.1} parent=11 // pred_check
        %p218 = pneg %p144
      $region30: #{dqn_forward.1} parent=11 // pred_check_branch
        %220 = sbr.rel (%p218) target = $region32
      $region31: #{dqn_forward.1} parent=11 // pred_region
        _
      $region32: #{dqn_forward.1} parent=11 // pred_fallthru
        _
      // Predicated region
      $region33: #{dqn_forward.1} parent=11 // pred_check
        %p221 = pneg %p165
      $region34: #{dqn_forward.1} parent=11 // pred_check_branch
        %223 = sbr.rel (%p221) target = $region36
      $region35: #{dqn_forward.1} parent=11 // pred_region
        _
      $region36: #{dqn_forward.1} parent=11 // pred_fallthru
        _
    $region12: #{dqn_forward.1} parent=5 // pred_fallthru
      _
    %p224 = scmp.lt.s32.totalorder %s13, 2
    // Predicated region
    $region37: #{dqn_forward.1} parent=5 // pred_check
      %p225 = pneg %p224
    $region38: #{dqn_forward.1} parent=5 // pred_check_branch
      %227 = sbr.rel (%p225) target = $region40
    $region39: #{dqn_forward.1} parent=5 // pred_region
      // Predicated region
      $region41: #{dqn_forward.1} parent=39 // pred_check
        %p228 = pneg %p33
      $region42: #{dqn_forward.1} parent=39 // pred_check_branch
        %230 = sbr.rel (%p228) target = $region44
      $region43: #{dqn_forward.1} parent=39 // pred_region
        %s231 = smul.u32 4, %s13
        %p232 = scmp.lt.s32.totalorder %s231, 7
        %s233 = scalar_select %p232, %s231, 7
        %s234 = smul.addr %s233, 4
        %s235 = scalar_lea.vmem %s0, %s234
        %s236 = smul.u32 4, %s13
      $region44: #{dqn_forward.1} parent=39 // pred_fallthru
        _
    $region40: #{dqn_forward.1} parent=5 // pred_fallthru
      _
    %p237 = scmp.le.s32.totalorder 1, %s13
    %p238 = scmp.lt.s32.totalorder %s13, 3
    %p239 = pnand %p237, %p238
    %p240 = pneg %p239
    // Predicated region
    $region45: #{dqn_forward.1} parent=5 // pred_check
      _
    $region46: #{dqn_forward.1} parent=5 // pred_check_branch
      %242 = sbr.rel (%p239) target = $region48
    $region47: #{dqn_forward.1} parent=5 // pred_region
      %s243 = ssub.s32 %s13, 1
      %s244 = smul.u32 4, %s18
      %p245 = scmp.lt.s32.totalorder %s244, 7
      %s246 = scalar_select %p245, %s244, 7
      %s247 = smul.addr %s246, 4
      %s248 = scalar_lea.vmem %s0, %s247
      %p249 = pneg %p39
      %p250 = pneg %p36
      %p251 = pneg %p60
      %p252 = pneg %p57
      %p253 = pneg %p81
      %p254 = pneg %p78
      %p255 = pneg %p102
      %p256 = pneg %p99
      %p257 = pneg %p123
      %p258 = pneg %p120
      %p259 = pneg %p144
      %p260 = pneg %p141
      %p261 = pneg %p165
      %p262 = pneg %p162
      %p263 = pneg %p191
      %p264 = pneg %p188
      %s265 = smul.u32 4, %s18
      %p266 = scmp.lt.s32.totalorder %s265, 7
      %s267 = scalar_select %p266, %s265, 7
      %s268 = smul.addr %s267, 8
      %s269 = scalar_lea.vmem %s7, %s268
      %s270 = smul.u32 4, %s18
      %p271 = scmp.lt.s32.totalorder %s270, 7
      %s272 = scalar_select %p271, %s270, 7
      %s273 = smul.addr %s272, 4
      %s274 = scalar_lea.vmem %s0, %s273
      %s275 = smul.u32 4, %s18
      %s276 = smul.u32 4, %s18
      %p277 = scmp.lt.s32.totalorder %s276, 7
      %s278 = scalar_select %p277, %s276, 7
      %s279 = smul.addr %s278, 8
      %s280 = scalar_lea.vmem %s7, %s279
      %s281 = smul.u32 4, %s18
      %v283 = vld [vmem:[%s274] sm:$0xf]
      %v284 = vld [vmem:[%s274 + $0x4] sm:$0xf]
      %v285 = vld [vmem:[%s274 + $0x8] sm:$0xf]
      %v286 = vld [vmem:[%s274 + $0xc] sm:$0xf]
      %v287 = vld [vmem:[%s1] sm:$0xf]
      %v288 = vld [vmem:[%s1 + $0x4] sm:$0xf]
      %v289 = vld [vmem:[%s1 + $0x8] sm:$0xf]
      %v290 = vld [vmem:[%s1 + $0xc] sm:$0xf]
      %v291 = vld [vmem:[%s1 + $0x10] sm:$0xf]
      %v292 = vld [vmem:[%s1 + $0x14] sm:$0xf]
      %v293 = vld [vmem:[%s1 + $0x18] sm:$0xf]
      %v294 = vld [vmem:[%s1 + $0x1c] sm:$0xf]
      %v295 = vld [vmem:[%s1 + $0x20] sm:$0xf]
      %v296 = vld [vmem:[%s1 + $0x24] sm:$0xf]
      %v297 = vld [vmem:[%s1 + $0x28] sm:$0xf]
      %v298 = vld [vmem:[%s1 + $0x2c] sm:$0xf]
      %v299 = vld [vmem:[%s1 + $0x30] sm:$0xf]
      %v300 = vld [vmem:[%s1 + $0x34] sm:$0xf]
      %v301 = vld [vmem:[%s1 + $0x38] sm:$0xf]
      %v302 = vld [vmem:[%s1 + $0x3c] sm:$0xf]
      %v303 = vld [vmem:[%s2] sm:$0x1]
      %v305 = vlaneseq
      %v306 = vshrl.u32 %v305, 7
      %v307 = vsub.s32 0, %v306
      %v308 = vrot.slane %v303, %v307
      %v314 = vunpack.c.l.b16 %v283
      %v315 = vunpack.c.l.b16 %v284
      %v316 = vunpack.c.l.b16 %v285
      %v317 = vunpack.c.l.b16 %v286
      %v318 = vpack.c.b16 %v315, %v314
      %v319 = vpack.c.b16 %v317, %v316
      %v338 = vunpack.c.l.b16 %v287
      %v339 = vunpack.c.l.b16 %v288
      %v340 = vunpack.c.l.b16 %v289
      %v341 = vunpack.c.l.b16 %v290
      %v342 = vunpack.c.l.b16 %v291
      %v343 = vunpack.c.l.b16 %v292
      %v344 = vunpack.c.l.b16 %v293
      %v345 = vunpack.c.l.b16 %v294
      %v346 = vunpack.c.l.b16 %v295
      %v347 = vunpack.c.l.b16 %v296
      %v348 = vunpack.c.l.b16 %v297
      %v349 = vunpack.c.l.b16 %v298
      %v350 = vunpack.c.l.b16 %v299
      %v351 = vunpack.c.l.b16 %v300
      %v352 = vunpack.c.l.b16 %v301
      %v353 = vunpack.c.l.b16 %v302
      %v354 = vpack.c.b16 %v339, %v338
      %v355 = vpack.c.b16 %v341, %v340
      %v356 = vpack.c.b16 %v343, %v342
      %v357 = vpack.c.b16 %v345, %v344
      %v358 = vpack.c.b16 %v347, %v346
      %v359 = vpack.c.b16 %v349, %v348
      %v360 = vpack.c.b16 %v351, %v350
      %v361 = vpack.c.b16 %v353, %v352
      %370 = vmatprep.subr.bf16.mxu0 0
      %371 = vmatpush1.bf16.msra.mxu0 %v361
      %372 = vmatprep.subr.bf16.mxu0 0
      %373 = vmatpush1.bf16.msra.mxu0 %v360
      %374 = vmatprep.subr.bf16.mxu0 0
      %375 = vmatpush1.bf16.msra.mxu0 %v359
      %376 = vmatprep.subr.bf16.mxu0 0
      %377 = vmatpush1.bf16.msra.mxu0 %v358
      %378 = vmatprep.subr.bf16.mxu0 0
      %379 = vmatpush1.bf16.msra.mxu0 %v357
      %380 = vmatprep.subr.bf16.mxu0 0
      %381 = vmatpush1.bf16.msra.mxu0 %v356
      %382 = vmatprep.subr.bf16.mxu0 0
      %383 = vmatpush1.bf16.msra.mxu0 %v355
      %384 = vmatprep.subr.bf16.mxu0 0
      %385 = vmatpush1.bf16.msra.mxu0 %v354
      %386 = vmatprep.subr.bf16.mxu0 0
      %387 = vmatpush2.bf16.msra.mxu0 0
      %388 = vmatprep.subr.bf16.mxu0 0
      %389 = vmatpush2.bf16.msra.mxu0 0
      %390 = vmatprep.subr.bf16.mxu0 0
      %391 = vmatpush2.bf16.msra.mxu0 0
      %392 = vmatprep.subr.bf16.mxu0 0
      %393 = vmatpush2.bf16.msra.mxu0 0
      %394 = vmatprep.subr.bf16.mxu0 0
      %395 = vmatpush2.bf16.msra.mxu0 0
      %396 = vmatprep.subr.bf16.mxu0 0
      %397 = vmatpush2.bf16.msra.mxu0 0
      %398 = vmatprep.subr.bf16.mxu0 0
      %399 = vmatpush2.bf16.msra.mxu0 0
      %400 = vmatprep.subr.bf16.mxu0 0
      %401 = vmatpush2.bf16.msra.mxu0 0
      %402 = vmatprep.mubr.bf16.mxu0 0
      %403 = vmatmul.mubr.bf16.gmra.mxu0 %v318
      %v404 = vpop.f32.mrf.mxu0
      %v405 = vadd.f32 %v308, %v404
      %v406 = vpop.f32.mrf.mxu0
      %v407 = vpop.f32.mrf.mxu0
      %v408 = vadd.f32 %v308, %v407
      %v409 = vpop.f32.mrf.mxu0
      %410 = vmatprep.mubr.bf16.mxu0 0
      %411 = vmatmul.mubr.bf16.gmra.mxu0 %v319
      %v412 = vpop.f32.mrf.mxu0
      %v413 = vadd.f32 %v308, %v412
      %v414 = vpop.f32.mrf.mxu0
      %v415 = vpop.f32.mrf.mxu0
      %v416 = vadd.f32 %v308, %v415
      %v417 = vpop.f32.mrf.mxu0
      %418 = vdwg.mxu0
      %v419 = vmax.f32 %v405, 0.0
      %v420 = vmax.f32 %v408, 0.0
      %v421 = vmax.f32 %v413, 0.0
      %v422 = vmax.f32 %v416, 0.0
      %v423 = vpack.c.bf16 %v420, %v419
      %v424 = vpack.c.bf16 %v422, %v421
      %v425 = vld [vmem:[%s3] sm:$0xf]
      %v426 = vld [vmem:[%s3 + $0x4] sm:$0xf]
      %v427 = vld [vmem:[%s3 + $0x8] sm:$0xf]
      %v428 = vld [vmem:[%s3 + $0xc] sm:$0xf]
      %v429 = vld [vmem:[%s3 + $0x10] sm:$0xf]
      %v430 = vld [vmem:[%s3 + $0x14] sm:$0xf]
      %v431 = vld [vmem:[%s3 + $0x18] sm:$0xf]
      %v432 = vld [vmem:[%s3 + $0x1c] sm:$0xf]
      %v433 = vld [vmem:[%s3 + $0x20] sm:$0xf]
      %v434 = vld [vmem:[%s3 + $0x24] sm:$0xf]
      %v435 = vld [vmem:[%s3 + $0x28] sm:$0xf]
      %v436 = vld [vmem:[%s3 + $0x2c] sm:$0xf]
      %v437 = vld [vmem:[%s3 + $0x30] sm:$0xf]
      %v438 = vld [vmem:[%s3 + $0x34] sm:$0xf]
      %v439 = vld [vmem:[%s3 + $0x38] sm:$0xf]
      %v440 = vld [vmem:[%s3 + $0x3c] sm:$0xf]
      %v441 = vld [vmem:[%s4] sm:$0x1]
      %v443 = vlaneseq
      %v444 = vshrl.u32 %v443, 7
      %v445 = vsub.s32 0, %v444
      %v446 = vrot.slane %v441, %v445
      %v464 = vunpack.c.l.b16 %v425
      %v465 = vunpack.c.l.b16 %v426
      %v466 = vunpack.c.l.b16 %v427
      %v467 = vunpack.c.l.b16 %v428
      %v468 = vunpack.c.l.b16 %v429
      %v469 = vunpack.c.l.b16 %v430
      %v470 = vunpack.c.l.b16 %v431
      %v471 = vunpack.c.l.b16 %v432
      %v472 = vunpack.c.l.b16 %v433
      %v473 = vunpack.c.l.b16 %v434
      %v474 = vunpack.c.l.b16 %v435
      %v475 = vunpack.c.l.b16 %v436
      %v476 = vunpack.c.l.b16 %v437
      %v477 = vunpack.c.l.b16 %v438
      %v478 = vunpack.c.l.b16 %v439
      %v479 = vunpack.c.l.b16 %v440
      %v480 = vpack.c.b16 %v465, %v464
      %v481 = vpack.c.b16 %v467, %v466
      %v482 = vpack.c.b16 %v469, %v468
      %v483 = vpack.c.b16 %v471, %v470
      %v484 = vpack.c.b16 %v473, %v472
      %v485 = vpack.c.b16 %v475, %v474
      %v486 = vpack.c.b16 %v477, %v476
      %v487 = vpack.c.b16 %v479, %v478
      %496 = vmatprep.subr.bf16.mxu0 0
      %497 = vmatpush1.bf16.msra.mxu0 %v487
      %498 = vmatprep.subr.bf16.mxu0 0
      %499 = vmatpush1.bf16.msra.mxu0 %v486
      %500 = vmatprep.subr.bf16.mxu0 0
      %501 = vmatpush1.bf16.msra.mxu0 %v485
      %502 = vmatprep.subr.bf16.mxu0 0
      %503 = vmatpush1.bf16.msra.mxu0 %v484
      %504 = vmatprep.subr.bf16.mxu0 0
      %505 = vmatpush1.bf16.msra.mxu0 %v483
      %506 = vmatprep.subr.bf16.mxu0 0
      %507 = vmatpush1.bf16.msra.mxu0 %v482
      %508 = vmatprep.subr.bf16.mxu0 0
      %509 = vmatpush1.bf16.msra.mxu0 %v481
      %510 = vmatprep.subr.bf16.mxu0 0
      %511 = vmatpush1.bf16.msra.mxu0 %v480
      %512 = vmatprep.subr.bf16.mxu0 0
      %513 = vmatpush2.bf16.msra.mxu0 0
      %514 = vmatprep.subr.bf16.mxu0 0
      %515 = vmatpush2.bf16.msra.mxu0 0
      %516 = vmatprep.subr.bf16.mxu0 0
      %517 = vmatpush2.bf16.msra.mxu0 0
      %518 = vmatprep.subr.bf16.mxu0 0
      %519 = vmatpush2.bf16.msra.mxu0 0
      %520 = vmatprep.subr.bf16.mxu0 0
      %521 = vmatpush2.bf16.msra.mxu0 0
      %522 = vmatprep.subr.bf16.mxu0 0
      %523 = vmatpush2.bf16.msra.mxu0 0
      %524 = vmatprep.subr.bf16.mxu0 0
      %525 = vmatpush2.bf16.msra.mxu0 0
      %526 = vmatprep.subr.bf16.mxu0 0
      %527 = vmatpush2.bf16.msra.mxu0 0
      %528 = vmatprep.mubr.bf16.mxu0 0
      %529 = vmatmul.mubr.bf16.gmra.mxu0 %v423
      %v530 = vpop.f32.mrf.mxu0
      %v531 = vadd.f32 %v446, %v530
      %v532 = vpop.f32.mrf.mxu0
      %v533 = vpop.f32.mrf.mxu0
      %v534 = vadd.f32 %v446, %v533
      %v535 = vpop.f32.mrf.mxu0
      %536 = vmatprep.mubr.bf16.mxu0 0
      %537 = vmatmul.mubr.bf16.gmra.mxu0 %v424
      %v538 = vpop.f32.mrf.mxu0
      %v539 = vadd.f32 %v446, %v538
      %v540 = vpop.f32.mrf.mxu0
      %v541 = vpop.f32.mrf.mxu0
      %v542 = vadd.f32 %v446, %v541
      %v543 = vpop.f32.mrf.mxu0
      %544 = vdwg.mxu0
      %v545 = vmax.f32 %v531, 0.0
      %v546 = vmax.f32 %v534, 0.0
      %v547 = vmax.f32 %v539, 0.0
      %v548 = vmax.f32 %v542, 0.0
      %v549 = vpack.c.bf16 %v546, %v545
      %v550 = vpack.c.bf16 %v548, %v547
      %v551 = vld [vmem:[%s5] sm:$0xf]
      %v552 = vld [vmem:[%s5 + $0x4] sm:$0xf]
      %v553 = vld [vmem:[%s5 + $0x8] sm:$0xf]
      %v554 = vld [vmem:[%s5 + $0xc] sm:$0xf]
      %v555 = vld [vmem:[%s5 + $0x10] sm:$0xf]
      %v556 = vld [vmem:[%s5 + $0x14] sm:$0xf]
      %v557 = vld [vmem:[%s5 + $0x18] sm:$0xf]
      %v558 = vld [vmem:[%s5 + $0x1c] sm:$0xf]
      %v559 = vld [vmem:[%s5 + $0x20] sm:$0xf]
      %v560 = vld [vmem:[%s5 + $0x24] sm:$0xf]
      %v561 = vld [vmem:[%s5 + $0x28] sm:$0xf]
      %v562 = vld [vmem:[%s5 + $0x2c] sm:$0xf]
      %v563 = vld [vmem:[%s5 + $0x30] sm:$0xf]
      %v564 = vld [vmem:[%s5 + $0x34] sm:$0xf]
      %v565 = vld [vmem:[%s5 + $0x38] sm:$0xf]
      %v566 = vld [vmem:[%s5 + $0x3c] sm:$0xf]
      %v567 = vld [vmem:[%s6] sm:$0x1]
      %v569 = vlaneseq
      %v570 = vshrl.u32 %v569, 7
      %v571 = vsub.s32 0, %v570
      %v572 = vrot.slane %v567, %v571
      %v590 = vunpack.c.l.b16 %v551
      %v591 = vunpack.c.l.b16 %v552
      %v592 = vunpack.c.l.b16 %v553
      %v593 = vunpack.c.l.b16 %v554
      %v594 = vunpack.c.l.b16 %v555
      %v595 = vunpack.c.l.b16 %v556
      %v596 = vunpack.c.l.b16 %v557
      %v597 = vunpack.c.l.b16 %v558
      %v598 = vunpack.c.l.b16 %v559
      %v599 = vunpack.c.l.b16 %v560
      %v600 = vunpack.c.l.b16 %v561
      %v601 = vunpack.c.l.b16 %v562
      %v602 = vunpack.c.l.b16 %v563
      %v603 = vunpack.c.l.b16 %v564
      %v604 = vunpack.c.l.b16 %v565
      %v605 = vunpack.c.l.b16 %v566
      %v606 = vpack.c.b16 %v591, %v590
      %v607 = vpack.c.b16 %v593, %v592
      %v608 = vpack.c.b16 %v595, %v594
      %v609 = vpack.c.b16 %v597, %v596
      %v610 = vpack.c.b16 %v599, %v598
      %v611 = vpack.c.b16 %v601, %v600
      %v612 = vpack.c.b16 %v603, %v602
      %v613 = vpack.c.b16 %v605, %v604
      %622 = vmatprep.subr.bf16.mxu0 0
      %623 = vmatpush1.bf16.msra.mxu0 %v613
      %624 = vmatprep.subr.bf16.mxu0 0
      %625 = vmatpush1.bf16.msra.mxu0 %v612
      %626 = vmatprep.subr.bf16.mxu0 0
      %627 = vmatpush1.bf16.msra.mxu0 %v611
      %628 = vmatprep.subr.bf16.mxu0 0
      %629 = vmatpush1.bf16.msra.mxu0 %v610
      %630 = vmatprep.subr.bf16.mxu0 0
      %631 = vmatpush1.bf16.msra.mxu0 %v609
      %632 = vmatprep.subr.bf16.mxu0 0
      %633 = vmatpush1.bf16.msra.mxu0 %v608
      %634 = vmatprep.subr.bf16.mxu0 0
      %635 = vmatpush1.bf16.msra.mxu0 %v607
      %636 = vmatprep.subr.bf16.mxu0 0
      %637 = vmatpush1.bf16.msra.mxu0 %v606
      %638 = vmatprep.subr.bf16.mxu0 0
      %639 = vmatpush2.bf16.msra.mxu0 0
      %640 = vmatprep.subr.bf16.mxu0 0
      %641 = vmatpush2.bf16.msra.mxu0 0
      %642 = vmatprep.subr.bf16.mxu0 0
      %643 = vmatpush2.bf16.msra.mxu0 0
      %644 = vmatprep.subr.bf16.mxu0 0
      %645 = vmatpush2.bf16.msra.mxu0 0
      %646 = vmatprep.subr.bf16.mxu0 0
      %647 = vmatpush2.bf16.msra.mxu0 0
      %648 = vmatprep.subr.bf16.mxu0 0
      %649 = vmatpush2.bf16.msra.mxu0 0
      %650 = vmatprep.subr.bf16.mxu0 0
      %651 = vmatpush2.bf16.msra.mxu0 0
      %652 = vmatprep.subr.bf16.mxu0 0
      %653 = vmatpush2.bf16.msra.mxu0 0
      %654 = vmatprep.mubr.bf16.mxu0 0
      %655 = vmatmul.mubr.bf16.gmra.mxu0 %v549
      %v656 = vpop.f32.mrf.mxu0
      %v657 = vadd.f32 %v572, %v656
      %v658 = vpop.f32.mrf.mxu0
      %v659 = vpop.f32.mrf.mxu0
      %v660 = vadd.f32 %v572, %v659
      %v661 = vpop.f32.mrf.mxu0
      %662 = vmatprep.mubr.bf16.mxu0 0
      %663 = vmatmul.mubr.bf16.gmra.mxu0 %v550
      %v664 = vpop.f32.mrf.mxu0
      %v665 = vadd.f32 %v572, %v664
      %v666 = vpop.f32.mrf.mxu0
      %v667 = vpop.f32.mrf.mxu0
      %v668 = vadd.f32 %v572, %v667
      %v669 = vpop.f32.mrf.mxu0
      %670 = vdwg.mxu0
      %671 = vst [vmem:[%s280] sm:$0xff] %v657
      %672 = vst [vmem:[%s280 + $0x8] sm:$0xff] %v660
      %673 = vst [vmem:[%s280 + $0x10] sm:$0xff] %v665
      %674 = vst [vmem:[%s280 + $0x18] sm:$0xff] %v668
      %s675 = smul.u32 4, %s18
      %p676 = scmp.lt.s32.totalorder %s675, 7
      %s677 = scalar_select %p676, %s675, 7
      %s678 = smul.addr %s677, 8
      %s679 = scalar_lea.vmem %s7, %s678
      // Predicated region
      $region49: #{dqn_forward.1} parent=47 // pred_check
        %p680 = pneg %p188
      $region50: #{dqn_forward.1} parent=47 // pred_check_branch
        %682 = sbr.rel (%p680) target = $region52
      $region51: #{dqn_forward.1} parent=47 // pred_region
        %s683 = smul.u32 4, %s18
      $region52: #{dqn_forward.1} parent=47 // pred_fallthru
        _
    $region48: #{dqn_forward.1} parent=5 // pred_fallthru
      _
    %p684 = scmp.le.s32.totalorder 2, %s13
    // Predicated region
    $region53: #{dqn_forward.1} parent=5 // pred_check
      %p685 = pneg %p684
    $region54: #{dqn_forward.1} parent=5 // pred_check_branch
      %687 = sbr.rel (%p685) target = $region56
    $region55: #{dqn_forward.1} parent=5 // pred_region
      %s688 = ssub.s32 %s13, 2
      // Predicated region
      $region57: #{dqn_forward.1} parent=55 // pred_check
        %p689 = pneg %p194
      $region58: #{dqn_forward.1} parent=55 // pred_check_branch
        %691 = sbr.rel (%p689) target = $region60
      $region59: #{dqn_forward.1} parent=55 // pred_region
        %s692 = smul.u32 4, %s19
        %p693 = scmp.lt.s32.totalorder %s692, 7
        %s694 = scalar_select %p693, %s692, 7
        %s695 = smul.addr %s694, 8
        %s696 = scalar_lea.vmem %s7, %s695
      $region60: #{dqn_forward.1} parent=55 // pred_fallthru
        _
    $region56: #{dqn_forward.1} parent=5 // pred_fallthru
      _
  $region6: #{dqn_forward.1} parent=0 // loop_footer
    %s17 = sadd.s32 1, %s13
  $region7: #{dqn_forward.1} parent=0 // loop_footer_branch
    %12 = sbr.rel target = $region3
  $region8: #{dqn_forward.1} parent=0 // loop_exit
    _

</llo_original>
